<compile_context>
chip_gen: v5e
topology: v5e:2x2
jax: 0.10.0
libtpu: 0.0.40
codegen_flags: <defaults>
</compile_context>

<pallas_src>
import functools

import jax
import jax.numpy as jnp
from jax.experimental import pallas as pl
from jax.experimental.pallas import tpu as pltpu

BN_EPS = 1e-5
LANES = 128
TIME_TILE = 8          # sublane-aligned tile over the frame/time axis (grid axis 1)


def _round_up(x, m):
    return (x + m - 1) // m * m


def _vmem_limit_bytes():
    # Explicit scoped-VMEM limit sized per generation (v7x has only 64 MiB physical).
    try:
        cap = int(pltpu.get_tpu_info().vmem_capacity_bytes)
        return int(min(cap * 3 // 4, 96 * 1024 * 1024))
    except Exception:
        return 48 * 1024 * 1024


def _compiler_params():
    return pltpu.CompilerParams(
        dimension_semantics=("parallel", "parallel"),
        vmem_limit_bytes=_vmem_limit_bytes())


# ----------------------------- Pallas kernels ------------------------------

def stft_kernel(s_ref, sh_ref, w_ref, o_ref):
    # s_ref : [tt, win_inc]   hop-sized signal chunks for frames t0 .. t0+tt-1
    # sh_ref: [tt, win_inc]   next chunk block (halo; only first ratio-1 rows used)
    # w_ref : [win_len, F2pad] windowed rfft basis, lane-padded (resident)
    # o_ref : [tt, F2pad]     frames @ W  (bf16, lane-dense)
    tt, win_inc = s_ref.shape
    ratio = w_ref.shape[0] // win_inc
    sblk = jnp.concatenate([s_ref[...], sh_ref[0:ratio - 1, :]], axis=0)
    acc = jnp.zeros(o_ref.shape, jnp.float32)
    for q in range(ratio):
        acc += jnp.dot(sblk[q:q + tt, :],
                       w_ref[q * win_inc:(q + 1) * win_inc, :],
                       preferred_element_type=jnp.float32)
    o_ref[...] = acc.astype(o_ref.dtype)


def conv_bn_kernel(x_ref, xl_ref, w_ref, sc_ref, sh_ref, al_ref, o_ref, st_ref,
                   *, t_valid, kf_size):
    # One (batch, time-tile) step of: previous layer's BN+PReLU (applied on load)
    # -> ComplexConv2d (in-kernel im2col over 10 taps) -> raw output + BN partials.
    #
    # x_ref : [F_in, tt, C_in]   raw previous-layer output / STFT features (bf16)
    # xl_ref: [F_in, C_in]       last time column of the PREVIOUS tile (causal halo)
    # w_ref : [kf*2, C_in, Cout] fused complex-conv weight per tap (bf16, lane-padded)
    # sc/sh/al: [1, C_in]        BN scale/shift + PReLU slope of the previous layer
    #                            (identity for the first layer)
    # o_ref : [F_out, tt, Cout]  raw conv output (bf16)
    # st_ref: [8, Cout]          rows 0/1 = masked sum / sum-of-squares partials (f32)
    f_in, tt, c_in = x_ref.shape
    f_out, _, c_out = o_ref.shape
    t_idx = pl.program_id(1)

    def act(v):
        v = v.astype(jnp.float32) * sc_ref[...] + sh_ref[...]
        v = jnp.where(v >= 0.0, v, al_ref[...] * v)
        return v.astype(jnp.bfloat16)

    x_cur = act(x_ref[...])                                    # [F_in, tt, C_in]
    left = act(xl_ref[...])[:, None, :]                        # [F_in, 1, C_in]
    left = jnp.where(t_idx > 0, left, jnp.zeros_like(left))    # causal zero pad at t=0

    # Per-time-tap views aligned with the output tile (kt=0 is the delayed tap),
    # freq-padded 2/2 and split into even/odd freq rows so every stride-2 freq
    # tap below is a plain contiguous slice on leading dims (no strided slices).
    half = (f_in + 4) // 2
    taps = []
    for xk in (jnp.concatenate([left, x_cur[:, :tt - 1, :]], axis=1), x_cur):
        xkp = jnp.pad(xk, ((2, 2), (0, 0), (0, 0)))
        taps.append(xkp.reshape(half, 2, tt, c_in))

    acc = jnp.zeros((f_out * tt, c_out), jnp.float32)
    for kf in range(kf_size):
        q, r = kf // 2, kf % 2
        for kt in range(2):
            lhs = taps[kt][q:q + f_out, r, :, :].reshape(f_out * tt, c_in)
            acc += jnp.dot(lhs, w_ref[kf * 2 + kt],
                           preferred_element_type=jnp.float32)

    # BatchNorm partial sums over VALID output positions only (padded time rows
    # masked), taken from the f32 accumulator, written as a lane/sublane-dense block.
    jj = jax.lax.broadcasted_iota(jnp.int32, (f_out * tt, 1), 0) % tt
    mask = ((jj + t_idx * tt) < t_valid).astype(jnp.float32)
    am = acc * mask
    s = jnp.sum(am, axis=0, keepdims=True)
    ss = jnp.sum(am * acc, axis=0, keepdims=True)
    st_ref[...] = jnp.concatenate(
        [s, ss, jnp.zeros((6, c_out), jnp.float32)], axis=0)

    o_ref[...] = acc.reshape(f_out, tt, c_out).astype(o_ref.dtype)


def bn_prelu_kernel(x_ref, sc_ref, sh_ref, al_ref, o_ref):
    # Only used once, for the FINAL layer's BatchNorm + PReLU.
    v = x_ref[...].astype(jnp.float32) * sc_ref[...] + sh_ref[...]
    o_ref[...] = jnp.where(v >= 0.0, v, al_ref[...] * v)


# ----------------------------- pallas_call wrappers -------------------------

def run_stft(x, w, win_len, win_inc, tt=TIME_TILE):
    # ConvSTFT: pad (win_len - win_inc) both sides, hop win_inc, frames @ W.
    # The padded signal is reshaped into hop-sized chunks so the 4x-overlapped
    # frames matrix is never materialized in HBM.
    b, l = x.shape
    assert win_len % win_inc == 0
    ratio = win_len // win_inc
    assert ratio <= tt + 1
    f2pad = w.shape[1]
    pad = win_len - win_inc
    t = (l + 2 * pad - win_len) // win_inc + 1
    t_pad = _round_up(t, tt)
    n_t = t_pad // tt
    m = t_pad + tt                               # one extra chunk block for the halo
    xp = jnp.pad(x, ((0, 0), (pad, pad)))
    xp = jnp.pad(xp, ((0, 0), (0, m * win_inc - xp.shape[1])))
    s = xp.reshape(b, m, win_inc)
    specs = pl.pallas_call(
        stft_kernel,
        out_shape=jax.ShapeDtypeStruct((b, t_pad, f2pad), jnp.bfloat16),
        grid_spec=pltpu.PrefetchScalarGridSpec(
            num_scalar_prefetch=0,
            grid=(b, n_t),
            in_specs=[
                pl.BlockSpec((None, tt, win_inc), lambda i, j: (i, j, 0)),
                pl.BlockSpec((None, tt, win_inc), lambda i, j: (i, j + 1, 0)),
                pl.BlockSpec((win_len, f2pad), lambda i, j: (0, 0)),
            ],
            out_specs=pl.BlockSpec((None, tt, f2pad), lambda i, j: (i, j, 0))),
        compiler_params=_compiler_params(),
    )(s, s, w)
    return specs, t, t_pad


def run_conv_layer(x, w, scale, shift, alpha, *, f_out, t_valid, tt=TIME_TILE,
                   kf_size=5):
    # x: [B, F_in, T_pad, C_in] raw previous output / STFT features (bf16)
    # w: [kf*2, C_in, C_out_pad] fused complex-conv taps (bf16)
    # scale/shift/alpha: [1, C_in] f32 -- previous layer's BN+PReLU, applied on load.
    b, f_in, t_pad, c_in = x.shape
    n_t = t_pad // tt
    c_out = w.shape[2]

    # Causal halo: last time column of every previous tile (zeros for tile 0),
    # gathered once in XLA (~1/tt of the activation bytes) so the kernel reads
    # the activation itself exactly once.
    lcols = x[:, :, tt - 1:t_pad - 1:tt, :]
    lcols = jnp.pad(lcols, ((0, 0), (0, 0), (1, 0), (0, 0)))
    lcols = jnp.transpose(lcols, (0, 2, 1, 3))               # [B, n_t, F_in, C_in]

    kern = functools.partial(conv_bn_kernel, t_valid=t_valid, kf_size=kf_size)
    out, stats = pl.pallas_call(
        kern,
        out_shape=(jax.ShapeDtypeStruct((b, f_out, t_pad, c_out), jnp.bfloat16),
                   jax.ShapeDtypeStruct((b, n_t, 8, c_out), jnp.float32)),
        grid_spec=pltpu.PrefetchScalarGridSpec(
            num_scalar_prefetch=0,
            grid=(b, n_t),
            in_specs=[
                pl.BlockSpec((None, f_in, tt, c_in), lambda i, j: (i, 0, j, 0)),
                pl.BlockSpec((None, None, f_in, c_in), lambda i, j: (i, j, 0, 0)),
                # TODO(synk): pl.Buffered(1) on the resident weight spec would save a
                # duplicate weight buffer inside v7x's 64 MiB VMEM at real sizes.
                pl.BlockSpec((kf_size * 2, c_in, c_out), lambda i, j: (0, 0, 0)),
                pl.BlockSpec((1, c_in), lambda i, j: (0, 0)),
                pl.BlockSpec((1, c_in), lambda i, j: (0, 0)),
                pl.BlockSpec((1, c_in), lambda i, j: (0, 0)),
            ],
            out_specs=(
                pl.BlockSpec((None, f_out, tt, c_out), lambda i, j: (i, 0, j, 0)),
                pl.BlockSpec((None, None, 8, c_out), lambda i, j: (i, j, 0, 0)),
            )),
        compiler_params=_compiler_params(),
    )(x, lcols, w, scale, shift, alpha)
    return out, stats


def run_bn_prelu(x, scale, shift, alpha, tt=TIME_TILE):
    b, f, t_pad, c = x.shape
    n_t = t_pad // tt
    return pl.pallas_call(
        bn_prelu_kernel,
        out_shape=jax.ShapeDtypeStruct((b, f, t_pad, c), jnp.float32),
        grid_spec=pltpu.PrefetchScalarGridSpec(
            num_scalar_prefetch=0,
            grid=(b, n_t),
            in_specs=[pl.BlockSpec((None, f, tt, c), lambda i, j: (i, 0, j, 0)),
                      pl.BlockSpec((1, c), lambda i, j: (0, 0)),
                      pl.BlockSpec((1, c), lambda i, j: (0, 0)),
                      pl.BlockSpec((1, c), lambda i, j: (0, 0))],
            out_specs=pl.BlockSpec((None, f, tt, c), lambda i, j: (i, 0, j, 0))),
        compiler_params=_compiler_params(),
    )(x, scale, shift, alpha)


# ----------------------------- JAX glue -------------------------------------

def make_stft_kernel(win_len, fft_len):
    # ConvSTFT 'complex' kernel: rfft basis of size fft_len truncated to win_len
    # taps, times a periodic Hann window ('hanning', fftbins=True).  Lane dim
    # padded to a multiple of 128 for lane-dense stores.
    n = jnp.arange(win_len)
    window = 0.5 - 0.5 * jnp.cos(2.0 * jnp.pi * n / win_len)
    fb = jnp.fft.rfft(jnp.eye(fft_len), axis=-1)[:win_len]           # [win, nf] complex
    kernel = jnp.concatenate([jnp.real(fb), jnp.imag(fb)], axis=1)   # [win, 2*nf]
    w = (kernel * window[:, None]).astype(jnp.float32)
    f2_pad = _round_up(w.shape[1], LANES)
    if f2_pad != w.shape[1]:
        w = jnp.pad(w, ((0, 0), (0, f2_pad - w.shape[1])))
    return w


def stft_to_features(specs, nf):
    # specs: [B, T_pad, F2pad] bf16 with lanes [real(nf) | imag(nf) | pad]
    # -> channel-last conv input [B, nf-1, T_pad, 2]  (drop DC bin: cspecs[:, :, 1:])
    real = specs[:, :, 1:nf]
    imag = specs[:, :, nf + 1:2 * nf]
    feat = jnp.stack([real, imag], axis=-1)           # [B, T_pad, nf-1, 2]
    return jnp.transpose(feat, (0, 2, 1, 3))          # [B, nf-1, T_pad, 2]


def bn_affine_from_stats(stats, n_valid, eps=BN_EPS):
    # stats: [B, n_t, 8, Cout] per-tile [sum; sumsq; 0...] partials over VALID rows.
    tot = jnp.sum(stats, axis=(0, 1))                          # [8, Cout]
    mean = tot[0] / n_valid
    var = jnp.maximum(tot[1] / n_valid - mean * mean, 0.0)     # biased var (train BN)
    scale = jax.lax.rsqrt(var + eps)
    shift = -mean * scale
    return scale[None, :], shift[None, :]                      # [1, Cout] each


def init_params(key, cfg):
    kernel_num = [2] + list(cfg['kernel_num'])
    ks = cfg['kernel_size']
    params = {'stft_w': make_stft_kernel(cfg['win_len'], cfg['fft_len']),
              'encoder': []}
    c_in_store = 2                                    # stored lane width of the input
    for i in range(len(kernel_num) - 1):
        ci2 = kernel_num[i] // 2
        co2 = kernel_num[i + 1] // 2
        c_out_pad = _round_up(2 * co2, LANES)
        key, k1, k2 = jax.random.split(key, 3)
        # ComplexConv2d: nn.init.normal_(std=0.05); conv bias dropped (BatchNorm with
        # gamma=1/beta=0 subtracts the per-channel mean, cancelling any constant).
        wr = jax.random.normal(k1, (co2, ci2, ks, 2), jnp.float32) * 0.05
        wi = jax.random.normal(k2, (co2, ci2, ks, 2), jnp.float32) * 0.05
        # Per-tap fused complex weight [ktaps, C_in_store, C_out_pad] with
        # [pr|pi] @ [[Wr, Wi], [-Wi, Wr]] = [out_r | out_i]; pad rows/cols are zero.
        w = jnp.zeros((ks * 2, c_in_store, c_out_pad), jnp.float32)
        for kf in range(ks):
            for kt in range(2):
                wr_t = wr[:, :, kf, kt].T             # [ci2, co2]
                wi_t = wi[:, :, kf, kt].T
                blk = jnp.concatenate(
                    [jnp.concatenate([wr_t, wi_t], axis=1),
                     jnp.concatenate([-wi_t, wr_t], axis=1)], axis=0)
                w = w.at[kf * 2 + kt, :2 * ci2, :2 * co2].set(blk)
        params['encoder'].append({
            'w': w.astype(jnp.bfloat16),
            # nn.PReLU() default: a single shared slope 0.25 (broadcast per lane here).
            'alpha': jnp.full((1, c_out_pad), 0.25, jnp.float32),
            'c_out': 2 * co2,
        })
        c_in_store = c_out_pad
    return params


def dccrn_encoder_forward(x, params, cfg):
    b = x.shape[0]
    win_len, win_inc, fft_len = cfg['win_len'], cfg['win_inc'], cfg['fft_len']
    nf = fft_len // 2 + 1
    ks = cfg['kernel_size']
    tt = TIME_TILE

    specs, t, _ = run_stft(x, params['stft_w'], win_len, win_inc, tt)
    # spec_mags / spec_phase of the PyTorch forward are dead code -> omitted.
    out = stft_to_features(specs, nf)                 # [B, nf-1, T_pad, 2] bf16

    f_in = nf - 1
    # Identity "previous activation" for the first layer's input.
    scale = jnp.ones((1, 2), jnp.float32)
    shift = jnp.zeros((1, 2), jnp.float32)
    alpha = jnp.ones((1, 2), jnp.float32)
    for layer in params['encoder']:
        f_out = (f_in + 4 - ks) // 2 + 1
        out, stats = run_conv_layer(out, layer['w'], scale, shift, alpha,
                                    f_out=f_out, t_valid=t, tt=tt, kf_size=ks)
        scale, shift = bn_affine_from_stats(stats, b * f_out * t)
        alpha = layer['alpha']
        f_in = f_out

    # Final layer's BatchNorm + PReLU (earlier ones are folded into the next conv).
    y = run_bn_prelu(out, scale, shift, alpha, tt)    # [B, F_last, T_pad, Cpad] f32
    c_last = params['encoder'][-1]['c_out']
    y = y[:, :, :t, :c_last]                          # drop time / lane padding
    # PyTorch: out.view(B, C*D, T) with out = [B, C, D, T]
    y = jnp.transpose(y, (0, 3, 1, 2))                # [B, C, D, T]
    return y.reshape(b, c_last * f_in, t)


# ----------------------------- main ------------------------------------------

if __name__ == "__main__":
    # Small-shape configuration consistent with the module's __init__ signature.
    cfg = dict(win_len=64, win_inc=16, fft_len=64,
               kernel_size=5, kernel_num=[8, 16, 16])

    key = jax.random.PRNGKey(0)
    key, kp, kx = jax.random.split(key, 3)
    params = init_params(kp, cfg)

    B, L = 2, 208                      # -> T = 16 frames
    x = jax.random.normal(kx, (B, L), jnp.float32)

    out = dccrn_encoder_forward(x, params, cfg)
    out = jax.block_until_ready(out)

    # Expected final shape: [B, C_last * D_last, T] = [2, 16*4, 16]
    assert out.shape == (2, 64, 16), out.shape
    assert bool(jnp.all(jnp.isfinite(out)))
    print("KERNEL_OK")
</pallas_src>

<mosaic_0001>
module attributes {stable_mosaic.version = 11 : i64} {
  func.func @stft_kernel(%arg0: i32, %arg1: i32, %arg2: memref<1x8x16xf32, #tpu.memory_space<vmem>>, %arg3: memref<1x8x16xf32, #tpu.memory_space<vmem>>, %arg4: memref<64x128xf32, #tpu.memory_space<vmem>>, %arg5: memref<1x8x128xbf16, #tpu.memory_space<vmem>>) attributes {dimension_semantics = [#tpu.dimension_semantics<parallel>, #tpu.dimension_semantics<parallel>], iteration_bounds = array<i64: 2, 2>, scalar_prefetch = 0 : i64, scratch_operands = 0 : i64, tpu.core_type = #tpu.core_type<tc>, window_params = [{transform_indices = @transform_0, window_bounds = array<i64: 1, 8, 16>}, {transform_indices = @transform_1, window_bounds = array<i64: 1, 8, 16>}, {pipeline_mode = #tpu.pipeline_mode<synchronous>, transform_indices = @transform_2, window_bounds = array<i64: 64, 128>}, {transform_indices = @transform_3, window_bounds = array<i64: 1, 8, 128>}]} {
    %c0 = arith.constant 0 : index
    %c0_0 = arith.constant 0 : index
    %c0_1 = arith.constant 0 : index
    %0 = vector.load %arg2[%c0, %c0_0, %c0_1] : memref<1x8x16xf32, #tpu.memory_space<vmem>>, vector<1x8x16xf32>
    %1 = vector.shape_cast %0 : vector<1x8x16xf32> to vector<8x16xf32>
    %c0_2 = arith.constant 0 : index
    %c0_3 = arith.constant 0 : index
    %c0_4 = arith.constant 0 : index
    %2 = vector.load %arg3[%c0_2, %c0_3, %c0_4] : memref<1x8x16xf32, #tpu.memory_space<vmem>>, vector<1x3x16xf32>
    %3 = vector.shape_cast %2 : vector<1x3x16xf32> to vector<3x16xf32>
    %4 = tpu.concatenate %1, %3 in 0 : vector<8x16xf32>, vector<3x16xf32> -> vector<11x16xf32>
    %cst = arith.constant 0.000000e+00 : f32
    %5 = vector.broadcast %cst : f32 to vector<8x128xf32>
    %6 = vector.extract_strided_slice %4 {offsets = [0, 0], sizes = [8, 16], strides = [1, 1]} : vector<11x16xf32> to vector<8x16xf32>
    %c0_5 = arith.constant 0 : index
    %c0_6 = arith.constant 0 : index
    %7 = vector.load %arg4[%c0_5, %c0_6] : memref<64x128xf32, #tpu.memory_space<vmem>>, vector<16x128xf32>
    %cst_7 = arith.constant dense<0.000000e+00> : vector<8x128xf32>
    %8 = tpu.matmul %6, %7, %cst_7 {dimension_numbers = #tpu.dot_dimension_numbers<[1], [0], [0], [1], [0, 0, 1, 1], [], []>} : vector<8x16xf32>, vector<16x128xf32>, vector<8x128xf32> -> vector<8x128xf32>
    %9 = arith.addf %5, %8 : vector<8x128xf32>
    %10 = vector.extract_strided_slice %4 {offsets = [1, 0], sizes = [8, 16], strides = [1, 1]} : vector<11x16xf32> to vector<8x16xf32>
    %c16 = arith.constant 16 : index
    %c0_8 = arith.constant 0 : index
    %11 = vector.load %arg4[%c16, %c0_8] : memref<64x128xf32, #tpu.memory_space<vmem>>, vector<16x128xf32>
    %cst_9 = arith.constant dense<0.000000e+00> : vector<8x128xf32>
    %12 = tpu.matmul %10, %11, %cst_9 {dimension_numbers = #tpu.dot_dimension_numbers<[1], [0], [0], [1], [0, 0, 1, 1], [], []>} : vector<8x16xf32>, vector<16x128xf32>, vector<8x128xf32> -> vector<8x128xf32>
    %13 = arith.addf %9, %12 : vector<8x128xf32>
    %14 = vector.extract_strided_slice %4 {offsets = [2, 0], sizes = [8, 16], strides = [1, 1]} : vector<11x16xf32> to vector<8x16xf32>
    %c32 = arith.constant 32 : index
    %c0_10 = arith.constant 0 : index
    %15 = vector.load %arg4[%c32, %c0_10] : memref<64x128xf32, #tpu.memory_space<vmem>>, vector<16x128xf32>
    %cst_11 = arith.constant dense<0.000000e+00> : vector<8x128xf32>
    %16 = tpu.matmul %14, %15, %cst_11 {dimension_numbers = #tpu.dot_dimension_numbers<[1], [0], [0], [1], [0, 0, 1, 1], [], []>} : vector<8x16xf32>, vector<16x128xf32>, vector<8x128xf32> -> vector<8x128xf32>
    %17 = arith.addf %13, %16 : vector<8x128xf32>
    %18 = vector.extract_strided_slice %4 {offsets = [3, 0], sizes = [8, 16], strides = [1, 1]} : vector<11x16xf32> to vector<8x16xf32>
    %c48 = arith.constant 48 : index
    %c0_12 = arith.constant 0 : index
    %19 = vector.load %arg4[%c48, %c0_12] : memref<64x128xf32, #tpu.memory_space<vmem>>, vector<16x128xf32>
    %cst_13 = arith.constant dense<0.000000e+00> : vector<8x128xf32>
    %20 = tpu.matmul %18, %19, %cst_13 {dimension_numbers = #tpu.dot_dimension_numbers<[1], [0], [0], [1], [0, 0, 1, 1], [], []>} : vector<8x16xf32>, vector<16x128xf32>, vector<8x128xf32> -> vector<8x128xf32>
    %21 = arith.addf %17, %20 : vector<8x128xf32>
    %22 = arith.truncf %21 : vector<8x128xf32> to vector<8x128xbf16>
    %c0_14 = arith.constant 0 : index
    %c0_15 = arith.constant 0 : index
    %c0_16 = arith.constant 0 : index
    %23 = vector.load %arg5[%c0_14, %c0_15, %c0_16] : memref<1x8x128xbf16, #tpu.memory_space<vmem>>, vector<1x8x128xbf16>
    %24 = vector.shape_cast %23 : vector<1x8x128xbf16> to vector<8x128xbf16>
    %25 = vector.shape_cast %22 : vector<8x128xbf16> to vector<1x8x128xbf16>
    tpu.vector_store %arg5[%c0_14, %c0_15, %c0_16], %25 {strides = array<i32>} : memref<1x8x128xbf16, #tpu.memory_space<vmem>>, vector<1x8x128xbf16>,
    return
  }
  func.func @transform_0(%arg0: i32, %arg1: i32) -> (i32, i32, i32) {
    %c0_i32 = arith.constant 0 : i32
    %c0_i32_0 = arith.constant 0 : i32
    return %arg0, %arg1, %c0_i32 : i32, i32, i32
  }
  func.func @transform_1(%arg0: i32, %arg1: i32) -> (i32, i32, i32) {
    %c1_i32 = arith.constant 1 : i32
    %0 = arith.addi %arg1, %c1_i32 : i32
    %c0_i32 = arith.constant 0 : i32
    %c0_i32_0 = arith.constant 0 : i32
    return %arg0, %0, %c0_i32 : i32, i32, i32
  }
  func.func @transform_2(%arg0: i32, %arg1: i32) -> (i32, i32) {
    %c0_i32 = arith.constant 0 : i32
    %c0_i32_0 = arith.constant 0 : i32
    %c0_i32_1 = arith.constant 0 : i32
    return %c0_i32, %c0_i32_0 : i32, i32
  }
  func.func @transform_3(%arg0: i32, %arg1: i32) -> (i32, i32, i32) {
    %c0_i32 = arith.constant 0 : i32
    %c0_i32_0 = arith.constant 0 : i32
    return %arg0, %arg1, %c0_i32 : i32, i32, i32
  }
}

</mosaic_0001>

<llo_original>
// kernel: tpu_custom_call.1
$region0: #{tpu_custom_call.1}
  #allocation0 [shape = 'u32[]', space=smem, size = 0x4, offset = 0x4, fixed_abs, tag = 'smem constant byte address 0x4 - core index']
  #allocation1 [shape = 'u32[72,128]{1,0:T(1,128)}', space=vmem, size = 0x9000, scoped, tag = 'internal scratch']
  %s0 = inlined_call_operand.vmem [shape: f32[2,24,16], index: 0, kind: input, shape index: {}]
  %s1 = inlined_call_operand.vmem [shape: f32[2,24,16], index: 1, kind: input, shape index: {}]
  %s2 = inlined_call_operand.vmem [shape: f32[64,128], index: 2, kind: input, shape index: {}]
  %s3 = inlined_call_operand.hbm [shape: bf16[2,16,128], index: 3, kind: output, shape index: {}]
  %s4 = sld [smem:[#allocation0]]
  $region45: #{tpu_custom_call.1} parent=0
    _
  %s6 = ssub.s32 1, %s4
  %s7 = scalar_select 0, %s6, %s4
  $region1: #{tpu_custom_call.1} parent=0
    #allocation2 [shape = 'u8[4096]{0}', space=vmem, size = 0x1000, scoped, tag = 'output window, operand 0']
    #allocation3 [shape = 's32[2]{0}', space=sflag, size = 0x8, scoped, tag = 'scoped memory for tpu_custom_call.1']
    %8 = vsyncpa [#allocation3], 0
    %s9 = scalar_lea.sflag [#allocation3], 1
    %10 = vsyncpa %s9, 0
    loop: start=0, step=1, limit=6
    $region2: #{tpu_custom_call.1} parent=1 // loop_pre_header
      _
    $region3: #{tpu_custom_call.1} parent=1 // loop_header
      %s12 = sphi 0, %s16
      %p13 = scmp.ge.s32.totalorder %s12, 6
      %s19 = sphi 0, %s31
      %s20 = sphi 0, %s27
      %s21 = sphi 0, %s19
      %s22 = sphi 0, %s20
      %s23 = sphi 0, %s21
      %s24 = sphi 0, %s22
      %s36 = sphi 0, %s38
      %s39 = sphi 0, %s36
      %s40 = sphi 0, %s39
      %s56 = sphi 0, %s40
      %s66 = sphi 0, %s68
      %s69 = sphi 0, %s66
      %s70 = sphi 0, %s69
      %s86 = sphi 0, %s70
      %s90 = sphi 0, %s90
      %s92 = sphi 0, %s90
      %s93 = sphi 0, %s92
      %s107 = sphi 0, %s93
      %s115 = sphi 0, %s117
      %s118 = sphi 0, %s115
      %s119 = sphi 0, %s118
      %s135 = sphi 0, %s119
    $region4: #{tpu_custom_call.1} parent=1 // loop_header_branch
      %15 = sbr.rel (%p13) target = $region8
    $region5: #{tpu_custom_call.1} parent=1 // loop_body
      %s17 = ssub.s32 %s12, 1
      %s18 = ssub.s32 %s12, 2
      %s25 = sadd.s32 1, %s20
      %p26 = scmp.ge.s32.totalorder %s25, 2
      %s27 = scalar_select %p26, 0, %s25
      %s28 = sadd.s32 1, %s19
      %s29 = scalar_select %p26, %s28, %s19
      %p30 = scmp.ge.s32.totalorder %s29, 2
      %s31 = scalar_select %p30, 0, %s29
      %s32 = ssub.s32 %s19, %s31
      %s33 = ssub.s32 %s20, %s27
      %s34 = sor.u32 %s32, %s33
      %p35 = scmp.eq.s32.totalorder %s34, 0
      %s37 = sadd.s32 %s36, 1
      %s38 = scalar_select %p35, %s36, %s37
      %p41 = pneg %p35
      %p42 = scmp.eq.s32.totalorder %s12, 3
      %p43 = por %p41, %p42
      %p44 = scmp.ne.s32.totalorder %s36, %s39
      %p45 = scmp.eq.s32.totalorder %s12, 0
      %p46 = por %p44, %p45
      %p47 = scmp.ne.s32.totalorder %s36, %s39
      %p48 = scmp.eq.s32.totalorder %s17, 3
      %p49 = por %p47, %p48
      %p50 = scmp.ne.s32.totalorder %s39, %s40
      %p51 = scmp.eq.s32.totalorder %s17, 0
      %p52 = por %p50, %p51
      %p53 = scmp.ne.s32.totalorder %s39, %s40
      %p54 = scmp.eq.s32.totalorder %s18, 3
      %p55 = por %p53, %p54
      %p57 = scmp.ne.s32.totalorder %s40, %s56
      %p58 = scmp.eq.s32.totalorder %s18, 0
      %p59 = por %p57, %p58
      %s60 = sadd.s32 %s20, 1
      %s61 = sadd.s32 %s27, 1
      %s62 = ssub.s32 %s19, %s31
      %s63 = ssub.s32 %s60, %s61
      %s64 = sor.u32 %s62, %s63
      %p65 = scmp.eq.s32.totalorder %s64, 0
      %s67 = sadd.s32 %s66, 1
      %s68 = scalar_select %p65, %s66, %s67
      %p71 = pneg %p65
      %p72 = scmp.eq.s32.totalorder %s12, 3
      %p73 = por %p71, %p72
      %p74 = scmp.ne.s32.totalorder %s66, %s69
      %p75 = scmp.eq.s32.totalorder %s12, 0
      %p76 = por %p74, %p75
      %p77 = scmp.ne.s32.totalorder %s66, %s69
      %p78 = scmp.eq.s32.totalorder %s17, 3
      %p79 = por %p77, %p78
      %p80 = scmp.ne.s32.totalorder %s69, %s70
      %p81 = scmp.eq.s32.totalorder %s17, 0
      %p82 = por %p80, %p81
      %p83 = scmp.ne.s32.totalorder %s69, %s70
      %p84 = scmp.eq.s32.totalorder %s18, 3
      %p85 = por %p83, %p84
      %p87 = scmp.ne.s32.totalorder %s70, %s86
      %p88 = scmp.eq.s32.totalorder %s18, 0
      %p89 = por %p87, %p88
      %s91 = sadd.s32 %s90, 1
      %p94 = scmp.eq.s32.totalorder %s12, 3
      %p95 = scmp.ne.s32.totalorder %s90, %s92
      %p96 = scmp.eq.s32.totalorder %s12, 0
      %p97 = por %p95, %p96
      %p98 = scmp.ne.s32.totalorder %s90, %s92
      %p99 = scmp.eq.s32.totalorder %s17, 3
      %p100 = por %p98, %p99
      %p101 = scmp.ne.s32.totalorder %s92, %s93
      %p102 = scmp.eq.s32.totalorder %s17, 0
      %p103 = por %p101, %p102
      %p104 = scmp.ne.s32.totalorder %s92, %s93
      %p105 = scmp.eq.s32.totalorder %s18, 3
      %p106 = por %p104, %p105
      %p108 = scmp.ne.s32.totalorder %s93, %s107
      %p109 = scmp.eq.s32.totalorder %s18, 0
      %p110 = por %p108, %p109
      %s111 = ssub.s32 %s19, %s31
      %s112 = ssub.s32 %s20, %s27
      %s113 = sor.u32 %s111, %s112
      %p114 = scmp.eq.s32.totalorder %s113, 0
      %s116 = sadd.s32 %s115, 1
      %s117 = scalar_select %p114, %s115, %s116
      %p120 = pneg %p114
      %p121 = scmp.eq.s32.totalorder %s12, 3
      %p122 = por %p120, %p121
      %p123 = scmp.ne.s32.totalorder %s115, %s118
      %p124 = scmp.eq.s32.totalorder %s12, 0
      %p125 = por %p123, %p124
      %p126 = scmp.ne.s32.totalorder %s115, %s118
      %p127 = scmp.eq.s32.totalorder %s17, 3
      %p128 = por %p126, %p127
      %p129 = scmp.ne.s32.totalorder %s118, %s119
      %p130 = scmp.eq.s32.totalorder %s17, 0
      %p131 = por %p129, %p130
      %p132 = scmp.ne.s32.totalorder %s118, %s119
      %p133 = scmp.eq.s32.totalorder %s18, 3
      %p134 = por %p132, %p133
      %p136 = scmp.ne.s32.totalorder %s119, %s135
      %p137 = scmp.eq.s32.totalorder %s18, 0
      %p138 = por %p136, %p137
      %p139 = scmp.le.s32.totalorder 1, %s12
      %p140 = scmp.lt.s32.totalorder %s12, 5
      %p141 = pnand %p139, %p140
      %p142 = pneg %p141
      // Predicated region
      $region9: #{tpu_custom_call.1} parent=5 // pred_check
        _
      $region10: #{tpu_custom_call.1} parent=5 // pred_check_branch
        %144 = sbr.rel (%p141) target = $region12
      $region11: #{tpu_custom_call.1} parent=5 // pred_region
        %s145 = ssub.s32 %s12, 1
        // Predicated region
        $region13: #{tpu_custom_call.1} parent=11 // pred_check
          %p146 = pneg %p103
        $region14: #{tpu_custom_call.1} parent=11 // pred_check_branch
          %148 = sbr.rel (%p146) target = $region16
        $region15: #{tpu_custom_call.1} parent=11 // pred_region
          _
        $region16: #{tpu_custom_call.1} parent=11 // pred_fallthru
          _
      $region12: #{tpu_custom_call.1} parent=5 // pred_fallthru
        _
      %p149 = scmp.lt.s32.totalorder %s12, 4
      // Predicated region
      $region17: #{tpu_custom_call.1} parent=5 // pred_check
        %p150 = pneg %p149
      $region18: #{tpu_custom_call.1} parent=5 // pred_check_branch
        %152 = sbr.rel (%p150) target = $region20
      $region19: #{tpu_custom_call.1} parent=5 // pred_region
        // Predicated region
        $region21: #{tpu_custom_call.1} parent=19 // pred_check
          %p153 = pneg %p46
        $region22: #{tpu_custom_call.1} parent=19 // pred_check_branch
          %155 = sbr.rel (%p153) target = $region24
        $region23: #{tpu_custom_call.1} parent=19 // pred_region
          %p156 = scmp.lt.s32.totalorder %s19, 1
          %s157 = scalar_select %p156, %s19, 1
          %p158 = scmp.lt.s32.totalorder %s20, 2
          %s159 = scalar_select %p158, %s20, 2
          %s160 = smul.addr %s157, 3
          %s161 = sadd.s32 %s159, %s160
          %s162 = smul.addr %s161, 8
          %s163 = scalar_lea.vmem %s0, %s162
        $region24: #{tpu_custom_call.1} parent=19 // pred_fallthru
          _
        // Predicated region
        $region25: #{tpu_custom_call.1} parent=19 // pred_check
          %p164 = pneg %p76
        $region26: #{tpu_custom_call.1} parent=19 // pred_check_branch
          %166 = sbr.rel (%p164) target = $region28
        $region27: #{tpu_custom_call.1} parent=19 // pred_region
          %s167 = sadd.s32 %s20, 1
          %p168 = scmp.lt.s32.totalorder %s19, 1
          %s169 = scalar_select %p168, %s19, 1
          %p170 = scmp.lt.s32.totalorder %s167, 2
          %s171 = scalar_select %p170, %s167, 2
          %s172 = smul.addr %s169, 3
          %s173 = sadd.s32 %s171, %s172
          %s174 = smul.addr %s173, 8
          %s175 = scalar_lea.vmem %s1, %s174
          %s176 = sadd.s32 %s20, 1
        $region28: #{tpu_custom_call.1} parent=19 // pred_fallthru
          _
      $region20: #{tpu_custom_call.1} parent=5 // pred_fallthru
        _
      %p177 = scmp.le.s32.totalorder 1, %s12
      %p178 = scmp.lt.s32.totalorder %s12, 5
      %p179 = pnand %p177, %p178
      %p180 = pneg %p179
      // Predicated region
      $region29: #{tpu_custom_call.1} parent=5 // pred_check
        _
      $region30: #{tpu_custom_call.1} parent=5 // pred_check_branch
        %182 = sbr.rel (%p179) target = $region32
      $region31: #{tpu_custom_call.1} parent=5 // pred_region
        %s183 = ssub.s32 %s12, 1
        %p184 = scmp.lt.s32.totalorder %s21, 1
        %s185 = scalar_select %p184, %s21, 1
        %p186 = scmp.lt.s32.totalorder %s22, 2
        %s187 = scalar_select %p186, %s22, 2
        %s188 = smul.addr %s185, 3
        %s189 = sadd.s32 %s187, %s188
        %s190 = smul.addr %s189, 8
        %s191 = scalar_lea.vmem %s0, %s190
        %p192 = pneg %p52
        %p193 = pneg %p49
        %s194 = sadd.s32 %s22, 1
        %p195 = scmp.lt.s32.totalorder %s21, 1
        %s196 = scalar_select %p195, %s21, 1
        %p197 = scmp.lt.s32.totalorder %s194, 2
        %s198 = scalar_select %p197, %s194, 2
        %s199 = smul.addr %s196, 3
        %s200 = sadd.s32 %s198, %s199
        %s201 = smul.addr %s200, 8
        %s202 = scalar_lea.vmem %s1, %s201
        %p203 = pneg %p82
        %p204 = pneg %p79
        %p205 = pneg %p103
        %p206 = pneg %p100
        %p207 = pneg %p131
        %p208 = pneg %p128
        %s209 = sand.u32 %s118, 1
        %s210 = scalar_lea.sflag [#allocation3], %s209
        %s211 = sand.u32 %s118, 1
        %s212 = smul.addr %s211, 4
        %s213 = scalar_lea.vmem [#allocation2], %s212
        %p214 = scmp.lt.s32.totalorder %s21, 1
        %s215 = scalar_select %p214, %s21, 1
        %p216 = scmp.lt.s32.totalorder %s22, 2
        %s217 = scalar_select %p216, %s22, 2
        %s218 = smul.addr %s215, 3
        %s219 = sadd.s32 %s217, %s218
        %s220 = smul.addr %s219, 8
        %s221 = scalar_lea.vmem %s0, %s220
        %s222 = sadd.s32 %s22, 1
        %p223 = scmp.lt.s32.totalorder %s21, 1
        %s224 = scalar_select %p223, %s21, 1
        %p225 = scmp.lt.s32.totalorder %s222, 2
        %s226 = scalar_select %p225, %s222, 2
        %s227 = smul.addr %s224, 3
        %s228 = sadd.s32 %s226, %s227
        %s229 = smul.addr %s228, 8
        %s230 = scalar_lea.vmem %s1, %s229
        %s231 = sadd.s32 %s22, 1
        %v232 = vld [vmem:[%s221] sm:$0xff]
        %v233 = vld [vmem:[%s230] sm:$0x7]
        %v234 = vld [vmem:[%s2] sm:$0xff]
        %v235 = vld [vmem:[%s2 + $0x8] sm:$0xff]
        %v236 = vld [vmem:[%s2 + $0x10] sm:$0xff]
        %v237 = vld [vmem:[%s2 + $0x18] sm:$0xff]
        %vm240 = vcmask 1046528
        %v241 = vrot.slane %v232, 1
        %v242 = vrot.slane %v233, 1
        %v243 = vsel %vm240, %v241, %v242
        %vm244 = vcmask 130048
        %v245 = vsel %vm244, %v243, 0
        %247 = vmatpush.msra.mxu0 0.0
        %248 = vmatpush.msra.mxu0 0.0
        %249 = vmatpush.msra.mxu0 0.0
        %250 = vmatpush.msra.mxu0 0.0
        %251 = vmatpush.msra.mxu0 0.0
        %252 = vmatpush.msra.mxu0 0.0
        %253 = vmatpush.msra.mxu0 0.0
        %254 = vmatpush.msra.mxu0 0.0
        %255 = vmatpush.msra.mxu0 0.0
        %256 = vmatpush.msra.mxu0 0.0
        %257 = vmatpush.msra.mxu0 0.0
        %258 = vmatpush.msra.mxu0 0.0
        %259 = vmatpush.msra.mxu0 0.0
        %260 = vmatpush.msra.mxu0 0.0
        %261 = vmatpush.msra.mxu0 %v237
        %262 = vmatpush.msra.mxu0 %v236
        %263 = vmatmul.f32.gmra.mxu0 %v245
        %v264 = vpop.f32.mrf.mxu0
        %v265 = vadd.f32 0.0, %v264
        %266 = vdwg.mxu0
        %v267 = vsel %vm244, %v232, 0
        %269 = vmatpush.msra.mxu0 0.0
        %270 = vmatpush.msra.mxu0 0.0
        %271 = vmatpush.msra.mxu0 0.0
        %272 = vmatpush.msra.mxu0 0.0
        %273 = vmatpush.msra.mxu0 0.0
        %274 = vmatpush.msra.mxu0 0.0
        %275 = vmatpush.msra.mxu0 0.0
        %276 = vmatpush.msra.mxu0 0.0
        %277 = vmatpush.msra.mxu0 0.0
        %278 = vmatpush.msra.mxu0 0.0
        %279 = vmatpush.msra.mxu0 0.0
        %280 = vmatpush.msra.mxu0 0.0
        %281 = vmatpush.msra.mxu0 0.0
        %282 = vmatpush.msra.mxu0 0.0
        %283 = vmatpush.msra.mxu0 %v235
        %284 = vmatpush.msra.mxu0 %v234
        %285 = vmatmul.f32.gmra.mxu0 %v267
        %v286 = vpop.f32.mrf.mxu0
        %v287 = vadd.f32 %v265, %v286
        %288 = vdwg.mxu0
        %v289 = vld [vmem:[%s2 + $0x20] sm:$0xff]
        %v290 = vld [vmem:[%s2 + $0x28] sm:$0xff]
        %vm291 = vcmask 1045504
        %v292 = vrot.slane %v232, 2
        %v293 = vrot.slane %v233, 2
        %v294 = vsel %vm291, %v292, %v293
        %v295 = vsel %vm244, %v294, 0
        %297 = vmatpush.msra.mxu0 0.0
        %298 = vmatpush.msra.mxu0 0.0
        %299 = vmatpush.msra.mxu0 0.0
        %300 = vmatpush.msra.mxu0 0.0
        %301 = vmatpush.msra.mxu0 0.0
        %302 = vmatpush.msra.mxu0 0.0
        %303 = vmatpush.msra.mxu0 0.0
        %304 = vmatpush.msra.mxu0 0.0
        %305 = vmatpush.msra.mxu0 0.0
        %306 = vmatpush.msra.mxu0 0.0
        %307 = vmatpush.msra.mxu0 0.0
        %308 = vmatpush.msra.mxu0 0.0
        %309 = vmatpush.msra.mxu0 0.0
        %310 = vmatpush.msra.mxu0 0.0
        %311 = vmatpush.msra.mxu0 %v290
        %312 = vmatpush.msra.mxu0 %v289
        %313 = vmatmul.f32.gmra.mxu0 %v295
        %v314 = vpop.f32.mrf.mxu0
        %v315 = vadd.f32 0.0, %v314
        %316 = vdwg.mxu0
        %v317 = vadd.f32 %v287, %v315
        %v318 = vld [vmem:[%s2 + $0x30] sm:$0xff]
        %v319 = vld [vmem:[%s2 + $0x38] sm:$0xff]
        %vm320 = vcmask 1044480
        %v321 = vrot.slane %v232, 3
        %v322 = vrot.slane %v233, 3
        %v323 = vsel %vm320, %v321, %v322
        %v324 = vsel %vm244, %v323, 0
        %326 = vmatpush.msra.mxu0 0.0
        %327 = vmatpush.msra.mxu0 0.0
        %328 = vmatpush.msra.mxu0 0.0
        %329 = vmatpush.msra.mxu0 0.0
        %330 = vmatpush.msra.mxu0 0.0
        %331 = vmatpush.msra.mxu0 0.0
        %332 = vmatpush.msra.mxu0 0.0
        %333 = vmatpush.msra.mxu0 0.0
        %334 = vmatpush.msra.mxu0 0.0
        %335 = vmatpush.msra.mxu0 0.0
        %336 = vmatpush.msra.mxu0 0.0
        %337 = vmatpush.msra.mxu0 0.0
        %338 = vmatpush.msra.mxu0 0.0
        %339 = vmatpush.msra.mxu0 0.0
        %340 = vmatpush.msra.mxu0 %v319
        %341 = vmatpush.msra.mxu0 %v318
        %342 = vmatmul.f32.gmra.mxu0 %v324
        %v343 = vpop.f32.mrf.mxu0
        %v344 = vadd.f32 0.0, %v343
        %345 = vdwg.mxu0
        %v346 = vadd.f32 %v317, %v344
        %v347 = vpack.c.bf16 %v346, %v346
        %348 = vst [vmem:[%s213] sm:$0xf] %v347
        %s349 = sand.u32 %s118, 1
        %s350 = scalar_lea.sflag [#allocation3], %s349
        %s351 = sand.u32 %s118, 1
        %s352 = smul.addr %s351, 4
        %s353 = scalar_lea.vmem [#allocation2], %s352
        // Predicated region
        $region33: #{tpu_custom_call.1} parent=31 // pred_check
          %p354 = pneg %p128
        $region34: #{tpu_custom_call.1} parent=31 // pred_check_branch
          %356 = sbr.rel (%p354) target = $region36
        $region35: #{tpu_custom_call.1} parent=31 // pred_region
          %358 = vsyncadd %s350, 0
          %s359 = smul.addr %s21, 2
          %s360 = sadd.s32 %s22, %s359
          %s361 = smul.addr %s360, 4
          %s362 = scalar_lea.hbm %s3, %s361
          %s364 = sshll.u32 %s353, 4
          %s365 = int_to_ptr.vmem [resolvable:$true] %s364
          %s366 = sshll.u32 %s362, 4
          %s367 = int_to_ptr.hbm [resolvable:$true] %s366
          %369 = dma.vmem_to_hbm [thread:$0]  %s365, 64, %s367, %s350
        $region36: #{tpu_custom_call.1} parent=31 // pred_fallthru
          _
      $region32: #{tpu_custom_call.1} parent=5 // pred_fallthru
        _
      %p370 = scmp.le.s32.totalorder 2, %s12
      // Predicated region
      $region37: #{tpu_custom_call.1} parent=5 // pred_check
        %p371 = pneg %p370
      $region38: #{tpu_custom_call.1} parent=5 // pred_check_branch
        %373 = sbr.rel (%p371) target = $region40
      $region39: #{tpu_custom_call.1} parent=5 // pred_region
        %s374 = ssub.s32 %s12, 2
        // Predicated region
        $region41: #{tpu_custom_call.1} parent=39 // pred_check
          %p375 = pneg %p134
        $region42: #{tpu_custom_call.1} parent=39 // pred_check_branch
          %377 = sbr.rel (%p375) target = $region44
        $region43: #{tpu_custom_call.1} parent=39 // pred_region
          %s378 = sand.u32 %s119, 1
          %s379 = scalar_lea.sflag [#allocation3], %s378
          %s380 = sand.u32 %s119, 1
          %s381 = smul.addr %s380, 4
          %s382 = scalar_lea.vmem [#allocation2], %s381
          %384 = dma.done %s379, 64
        $region44: #{tpu_custom_call.1} parent=39 // pred_fallthru
          _
      $region40: #{tpu_custom_call.1} parent=5 // pred_fallthru
        _
    $region6: #{tpu_custom_call.1} parent=1 // loop_footer
      %s16 = sadd.s32 1, %s12
    $region7: #{tpu_custom_call.1} parent=1 // loop_footer_branch
      %11 = sbr.rel target = $region3
    $region8: #{tpu_custom_call.1} parent=1 // loop_exit
      _
    %385 = vsyncpa [#allocation3], 1
    %s386 = scalar_lea.sflag [#allocation3], 1
    %387 = vsyncpa %s386, 1

</llo_original>
